<compile_context>
chip_gen: v7x
topology: tpu7x:2x2x1
jax: 0.10.0
libtpu: 0.0.40
codegen_flags: <defaults>
</compile_context>

<pallas_src>
import jax
import jax.numpy as jnp
from jax.experimental import pallas as pl
from jax.experimental.pallas import tpu as pltpu

K_PAD = 896        # 784 padded to a multiple of 128 (aligned MXU contraction)
C_PAD = 128        # 10 classes padded to a full lane width (lane-dense stores)
NEG_INF = -1e30    # mask for padded class columns (baked into the padded bias)
MAX_TILE_B = 1024  # batch tile; keeps double-buffered tiles well inside VMEM


def _mlp_kernel(x_ref, w1_ref, b1_ref, w2_ref, b2_ref, w3_ref, b3_ref,
                w4_ref, b4_ref, o_ref):
    # fc1 + ReLU  (bf16 operands, f32 MXU accumulation, f32 VPU epilogue)
    h = jnp.dot(x_ref[...], w1_ref[...], preferred_element_type=jnp.float32)
    h = jnp.maximum(h + b1_ref[...], 0.0).astype(jnp.bfloat16)
    # fc2 + ReLU
    h = jnp.dot(h, w2_ref[...], preferred_element_type=jnp.float32)
    h = jnp.maximum(h + b2_ref[...], 0.0).astype(jnp.bfloat16)
    # fc3 + ReLU
    h = jnp.dot(h, w3_ref[...], preferred_element_type=jnp.float32)
    h = jnp.maximum(h + b3_ref[...], 0.0).astype(jnp.bfloat16)
    # fc4 (padded to 128 classes; padded columns get bias = -1e30 -> masked out)
    logits = jnp.dot(h, w4_ref[...], preferred_element_type=jnp.float32)
    logits = logits + b4_ref[...]
    # numerically stable log_softmax over the class axis (dim=1 in PyTorch)
    m = jnp.max(logits, axis=-1, keepdims=True)
    shifted = logits - m
    lse = jnp.log(jnp.sum(jnp.exp(shifted), axis=-1, keepdims=True))
    o_ref[...] = (shifted - lse).astype(o_ref.dtype)


def _round_up(n, m):
    return (n + m - 1) // m * m


def _pack_params(params):
    """Cast to bf16 and pad fc1 K (784->896) and fc4 N (10->128)."""
    w1, b1, w2, b2, w3, b3, w4, b4 = params
    w1p = jnp.zeros((K_PAD, 256), jnp.bfloat16).at[:784, :].set(w1.astype(jnp.bfloat16))
    w4p = jnp.zeros((64, C_PAD), jnp.bfloat16).at[:, :10].set(w4.astype(jnp.bfloat16))
    b4p = jnp.full((1, C_PAD), NEG_INF, jnp.float32).at[:, :10].set(
        b4.reshape(1, -1).astype(jnp.float32))
    return (w1p, b1.reshape(1, -1).astype(jnp.float32),
            w2.astype(jnp.bfloat16), b2.reshape(1, -1).astype(jnp.float32),
            w3.astype(jnp.bfloat16), b3.reshape(1, -1).astype(jnp.float32),
            w4p, b4p)


def classifier_forward(x_nchw, params):
    """x_nchw: (B, 1, 28, 28) -> (B, 10) log-probabilities (eval-mode forward)."""
    B = x_nchw.shape[0]
    x = x_nchw.reshape(B, -1).astype(jnp.bfloat16)                 # (B, 784)

    tile_b = min(MAX_TILE_B, _round_up(B, 8))
    b_pad = _round_up(B, tile_b)
    x = jnp.pad(x, ((0, b_pad - B), (0, K_PAD - x.shape[1])))      # (b_pad, 896)

    w1p, b1, w2, b2, w3, b3, w4p, b4p = _pack_params(params)

    const = lambda i: (0, 0)   # weights/biases: same block every step -> VMEM-resident

    flops = 2 * b_pad * (K_PAD * 256 + 256 * 128 + 128 * 64 + 64 * C_PAD)
    bytes_accessed = (b_pad * K_PAD * 2 + b_pad * C_PAD * 4
                      + (w1p.size + w2.size + w3.size + w4p.size) * 2
                      + (b1.size + b2.size + b3.size + b4p.size) * 4)

    out = pl.pallas_call(
        _mlp_kernel,
        out_shape=jax.ShapeDtypeStruct((b_pad, C_PAD), jnp.float32),
        grid=(b_pad // tile_b,),
        in_specs=[
            pl.BlockSpec((tile_b, K_PAD), lambda i: (i, 0)),       # streamed per tile
            pl.BlockSpec(w1p.shape, const),
            pl.BlockSpec(b1.shape, const),
            pl.BlockSpec(w2.shape, const),
            pl.BlockSpec(b2.shape, const),
            pl.BlockSpec(w3.shape, const),
            pl.BlockSpec(b3.shape, const),
            pl.BlockSpec(w4p.shape, const),
            pl.BlockSpec(b4p.shape, const),
        ],
        out_specs=pl.BlockSpec((tile_b, C_PAD), lambda i: (i, 0)),
        compiler_params=pltpu.CompilerParams(
            dimension_semantics=("parallel",)),
        cost_estimate=pl.CostEstimate(
            flops=flops,
            transcendentals=b_pad * C_PAD,
            bytes_accessed=bytes_accessed),
    )(x, w1p, b1, w2, b2, w3, b3, w4p, b4p)

    return out[:B, :10]


def init_params(key):
    """Deterministic init mimicking PyTorch nn.Linear default (U[-1/sqrt(in), 1/sqrt(in)])."""
    dims = [(784, 256), (256, 128), (128, 64), (64, 10)]
    params = []
    keys = jax.random.split(key, 2 * len(dims))
    for i, (din, dout) in enumerate(dims):
        bound = 1.0 / (din ** 0.5)
        w = jax.random.uniform(keys[2 * i], (din, dout), jnp.float32, -bound, bound)
        b = jax.random.uniform(keys[2 * i + 1], (1, dout), jnp.float32, -bound, bound)
        params.extend([w, b])
    return tuple(params)


def _reference(x_nchw, params):
    """Pure-JAX f32 eval-mode forward (dropout == identity)."""
    w1, b1, w2, b2, w3, b3, w4, b4 = params
    x = x_nchw.reshape(x_nchw.shape[0], -1).astype(jnp.float32)
    h = jnp.maximum(x @ w1 + b1, 0.0)
    h = jnp.maximum(h @ w2 + b2, 0.0)
    h = jnp.maximum(h @ w3 + b3, 0.0)
    logits = h @ w4 + b4
    return jax.nn.log_softmax(logits, axis=-1)


if __name__ == "__main__":
    key = jax.random.PRNGKey(0)
    kp, kx = jax.random.split(key)
    params = init_params(kp)

    # Small batch of MNIST-shaped inputs (NCHW, like PyTorch).
    B = 2
    x = jax.random.normal(kx, (B, 1, 28, 28), jnp.float32)

    out = classifier_forward(x, params)
    out = jax.block_until_ready(out)

    # Sanity: (B, 10) log-probabilities; rows sum to ~1 after exp; matches f32 ref.
    assert out.shape == (B, 10)
    row_sums = jnp.exp(out).sum(axis=-1)
    assert bool(jnp.all(jnp.abs(row_sums - 1.0) < 1e-3))
    ref = _reference(x, params)
    assert bool(jnp.all(jnp.abs(out - ref) < 5e-2))  # bf16 operands, f32 accumulation

    print("KERNEL_OK")
</pallas_src>

<mosaic_0001>
module attributes {stable_mosaic.version = 11 : i64} {
  func.func @_mlp_kernel(%arg0: i32, %arg1: memref<8x896xbf16, #tpu.memory_space<vmem>>, %arg2: memref<896x256xbf16, #tpu.memory_space<vmem>>, %arg3: memref<1x256xf32, #tpu.memory_space<vmem>>, %arg4: memref<256x128xbf16, #tpu.memory_space<vmem>>, %arg5: memref<1x128xf32, #tpu.memory_space<vmem>>, %arg6: memref<128x64xbf16, #tpu.memory_space<vmem>>, %arg7: memref<1x64xf32, #tpu.memory_space<vmem>>, %arg8: memref<64x128xbf16, #tpu.memory_space<vmem>>, %arg9: memref<1x128xf32, #tpu.memory_space<vmem>>, %arg10: memref<8x128xf32, #tpu.memory_space<vmem>>) attributes {dimension_semantics = [#tpu.dimension_semantics<parallel>], iteration_bounds = array<i64: 1>, scalar_prefetch = 0 : i64, scratch_operands = 0 : i64, tpu.core_type = #tpu.core_type<tc>, window_params = [{transform_indices = @transform_0, window_bounds = array<i64: 8, 896>}, {pipeline_mode = #tpu.pipeline_mode<synchronous>, transform_indices = @transform_1, window_bounds = array<i64: 896, 256>}, {pipeline_mode = #tpu.pipeline_mode<synchronous>, transform_indices = @transform_2, window_bounds = array<i64: 1, 256>}, {pipeline_mode = #tpu.pipeline_mode<synchronous>, transform_indices = @transform_3, window_bounds = array<i64: 256, 128>}, {pipeline_mode = #tpu.pipeline_mode<synchronous>, transform_indices = @transform_4, window_bounds = array<i64: 1, 128>}, {pipeline_mode = #tpu.pipeline_mode<synchronous>, transform_indices = @transform_5, window_bounds = array<i64: 128, 64>}, {pipeline_mode = #tpu.pipeline_mode<synchronous>, transform_indices = @transform_6, window_bounds = array<i64: 1, 64>}, {pipeline_mode = #tpu.pipeline_mode<synchronous>, transform_indices = @transform_7, window_bounds = array<i64: 64, 128>}, {pipeline_mode = #tpu.pipeline_mode<synchronous>, transform_indices = @transform_8, window_bounds = array<i64: 1, 128>}, {transform_indices = @transform_9, window_bounds = array<i64: 8, 128>}]} {
    %c0 = arith.constant 0 : index
    %c0_0 = arith.constant 0 : index
    %0 = vector.load %arg1[%c0, %c0_0] : memref<8x896xbf16, #tpu.memory_space<vmem>>, vector<8x896xbf16>
    %c0_1 = arith.constant 0 : index
    %c0_2 = arith.constant 0 : index
    %1 = vector.load %arg2[%c0_1, %c0_2] : memref<896x256xbf16, #tpu.memory_space<vmem>>, vector<896x256xbf16>
    %cst = arith.constant dense<0.000000e+00> : vector<8x256xf32>
    %2 = tpu.matmul %0, %1, %cst {dimension_numbers = #tpu.dot_dimension_numbers<[1], [0], [0], [1], [0, 0, 1, 1], [], []>} : vector<8x896xbf16>, vector<896x256xbf16>, vector<8x256xf32> -> vector<8x256xf32>
    %c0_3 = arith.constant 0 : index
    %c0_4 = arith.constant 0 : index
    %3 = vector.load %arg3[%c0_3, %c0_4] : memref<1x256xf32, #tpu.memory_space<vmem>>, vector<1x256xf32>
    %4 = vector.broadcast %3 : vector<1x256xf32> to vector<8x256xf32>
    %5 = arith.addf %2, %4 : vector<8x256xf32>
    %cst_5 = arith.constant 0.000000e+00 : f32
    %6 = vector.broadcast %cst_5 : f32 to vector<8x256xf32>
    %7 = arith.maximumf %5, %6 : vector<8x256xf32>
    %8 = arith.truncf %7 : vector<8x256xf32> to vector<8x256xbf16>
    %c0_6 = arith.constant 0 : index
    %c0_7 = arith.constant 0 : index
    %9 = vector.load %arg4[%c0_6, %c0_7] : memref<256x128xbf16, #tpu.memory_space<vmem>>, vector<256x128xbf16>
    %cst_8 = arith.constant dense<0.000000e+00> : vector<8x128xf32>
    %10 = tpu.matmul %8, %9, %cst_8 {dimension_numbers = #tpu.dot_dimension_numbers<[1], [0], [0], [1], [0, 0, 1, 1], [], []>} : vector<8x256xbf16>, vector<256x128xbf16>, vector<8x128xf32> -> vector<8x128xf32>
    %c0_9 = arith.constant 0 : index
    %c0_10 = arith.constant 0 : index
    %11 = vector.load %arg5[%c0_9, %c0_10] : memref<1x128xf32, #tpu.memory_space<vmem>>, vector<1x128xf32>
    %12 = vector.broadcast %11 : vector<1x128xf32> to vector<8x128xf32>
    %13 = arith.addf %10, %12 : vector<8x128xf32>
    %cst_11 = arith.constant 0.000000e+00 : f32
    %14 = vector.broadcast %cst_11 : f32 to vector<8x128xf32>
    %15 = arith.maximumf %13, %14 : vector<8x128xf32>
    %16 = arith.truncf %15 : vector<8x128xf32> to vector<8x128xbf16>
    %c0_12 = arith.constant 0 : index
    %c0_13 = arith.constant 0 : index
    %17 = vector.load %arg6[%c0_12, %c0_13] : memref<128x64xbf16, #tpu.memory_space<vmem>>, vector<128x64xbf16>
    %cst_14 = arith.constant dense<0.000000e+00> : vector<8x64xf32>
    %18 = tpu.matmul %16, %17, %cst_14 {dimension_numbers = #tpu.dot_dimension_numbers<[1], [0], [0], [1], [0, 0, 1, 1], [], []>} : vector<8x128xbf16>, vector<128x64xbf16>, vector<8x64xf32> -> vector<8x64xf32>
    %c0_15 = arith.constant 0 : index
    %c0_16 = arith.constant 0 : index
    %19 = vector.load %arg7[%c0_15, %c0_16] : memref<1x64xf32, #tpu.memory_space<vmem>>, vector<1x64xf32>
    %20 = vector.broadcast %19 : vector<1x64xf32> to vector<8x64xf32>
    %21 = arith.addf %18, %20 : vector<8x64xf32>
    %cst_17 = arith.constant 0.000000e+00 : f32
    %22 = vector.broadcast %cst_17 : f32 to vector<8x64xf32>
    %23 = arith.maximumf %21, %22 : vector<8x64xf32>
    %24 = arith.truncf %23 : vector<8x64xf32> to vector<8x64xbf16>
    %c0_18 = arith.constant 0 : index
    %c0_19 = arith.constant 0 : index
    %25 = vector.load %arg8[%c0_18, %c0_19] : memref<64x128xbf16, #tpu.memory_space<vmem>>, vector<64x128xbf16>
    %cst_20 = arith.constant dense<0.000000e+00> : vector<8x128xf32>
    %26 = tpu.matmul %24, %25, %cst_20 {dimension_numbers = #tpu.dot_dimension_numbers<[1], [0], [0], [1], [0, 0, 1, 1], [], []>} : vector<8x64xbf16>, vector<64x128xbf16>, vector<8x128xf32> -> vector<8x128xf32>
    %c0_21 = arith.constant 0 : index
    %c0_22 = arith.constant 0 : index
    %27 = vector.load %arg9[%c0_21, %c0_22] : memref<1x128xf32, #tpu.memory_space<vmem>>, vector<1x128xf32>
    %28 = vector.broadcast %27 : vector<1x128xf32> to vector<8x128xf32>
    %29 = arith.addf %26, %28 : vector<8x128xf32>
    %cst_23 = arith.constant dense<0xFF800000> : vector<8xf32>
    %30 = vector.multi_reduction <maximumf>, %29, %cst_23 [1] : vector<8x128xf32> to vector<8xf32>
    %31 = vector.shape_cast %30 : vector<8xf32> to vector<8x1xf32>
    %32 = vector.broadcast %31 : vector<8x1xf32> to vector<8x128xf32>
    %33 = arith.subf %29, %32 : vector<8x128xf32>
    %34 = math.exp %33 : vector<8x128xf32>
    %cst_24 = arith.constant dense<0.000000e+00> : vector<8xf32>
    %35 = vector.multi_reduction <add>, %34, %cst_24 [1] : vector<8x128xf32> to vector<8xf32>
    %36 = vector.shape_cast %35 : vector<8xf32> to vector<8x1xf32>
    %37 = math.log %36 : vector<8x1xf32>
    %38 = vector.broadcast %37 : vector<8x1xf32> to vector<8x128xf32>
    %39 = arith.subf %33, %38 : vector<8x128xf32>
    %c0_25 = arith.constant 0 : index
    %c0_26 = arith.constant 0 : index
    %40 = vector.load %arg10[%c0_25, %c0_26] : memref<8x128xf32, #tpu.memory_space<vmem>>, vector<8x128xf32>
    tpu.vector_store %arg10[%c0_25, %c0_26], %39 {strides = array<i32>} : memref<8x128xf32, #tpu.memory_space<vmem>>, vector<8x128xf32>,
    return
  }
  func.func @transform_0(%arg0: i32) -> (i32, i32) {
    %c0_i32 = arith.constant 0 : i32
    %c0_i32_0 = arith.constant 0 : i32
    return %arg0, %c0_i32 : i32, i32
  }
  func.func @transform_1(%arg0: i32) -> (i32, i32) {
    %c0_i32 = arith.constant 0 : i32
    %c0_i32_0 = arith.constant 0 : i32
    %c0_i32_1 = arith.constant 0 : i32
    return %c0_i32, %c0_i32_0 : i32, i32
  }
  func.func @transform_2(%arg0: i32) -> (i32, i32) {
    %c0_i32 = arith.constant 0 : i32
    %c0_i32_0 = arith.constant 0 : i32
    %c0_i32_1 = arith.constant 0 : i32
    return %c0_i32, %c0_i32_0 : i32, i32
  }
  func.func @transform_3(%arg0: i32) -> (i32, i32) {
    %c0_i32 = arith.constant 0 : i32
    %c0_i32_0 = arith.constant 0 : i32
    %c0_i32_1 = arith.constant 0 : i32
    return %c0_i32, %c0_i32_0 : i32, i32
  }
  func.func @transform_4(%arg0: i32) -> (i32, i32) {
    %c0_i32 = arith.constant 0 : i32
    %c0_i32_0 = arith.constant 0 : i32
    %c0_i32_1 = arith.constant 0 : i32
    return %c0_i32, %c0_i32_0 : i32, i32
  }
  func.func @transform_5(%arg0: i32) -> (i32, i32) {
    %c0_i32 = arith.constant 0 : i32
    %c0_i32_0 = arith.constant 0 : i32
    %c0_i32_1 = arith.constant 0 : i32
    return %c0_i32, %c0_i32_0 : i32, i32
  }
  func.func @transform_6(%arg0: i32) -> (i32, i32) {
    %c0_i32 = arith.constant 0 : i32
    %c0_i32_0 = arith.constant 0 : i32
    %c0_i32_1 = arith.constant 0 : i32
    return %c0_i32, %c0_i32_0 : i32, i32
  }
  func.func @transform_7(%arg0: i32) -> (i32, i32) {
    %c0_i32 = arith.constant 0 : i32
    %c0_i32_0 = arith.constant 0 : i32
    %c0_i32_1 = arith.constant 0 : i32
    return %c0_i32, %c0_i32_0 : i32, i32
  }
  func.func @transform_8(%arg0: i32) -> (i32, i32) {
    %c0_i32 = arith.constant 0 : i32
    %c0_i32_0 = arith.constant 0 : i32
    %c0_i32_1 = arith.constant 0 : i32
    return %c0_i32, %c0_i32_0 : i32, i32
  }
  func.func @transform_9(%arg0: i32) -> (i32, i32) {
    %c0_i32 = arith.constant 0 : i32
    %c0_i32_0 = arith.constant 0 : i32
    return %arg0, %c0_i32 : i32, i32
  }
}

</mosaic_0001>

<llo_original>
// kernel: tpu_custom_call.1
$region0: #{tpu_custom_call.1}
  #allocation0 [shape = 'u32[]', space=smem, size = 0x4, offset = 0x4, fixed_abs, tag = 'smem constant byte address 0x4 - core index']
  #allocation1 [shape = 'u32[144,128]{1,0:T(1,128)}', space=vmem, size = 0x12000, scoped, tag = 'internal scratch']
  %s0 = inlined_call_operand.vmem [shape: bf16[8,896], index: 0, kind: input, shape index: {}]
  %s1 = inlined_call_operand.hbm [shape: bf16[896,256], index: 1, kind: input, shape index: {}]
  %s2 = inlined_call_operand.vmem [shape: f32[1,256], index: 2, kind: input, shape index: {}]
  %s3 = inlined_call_operand.hbm [shape: bf16[256,128], index: 3, kind: input, shape index: {}]
  %s4 = inlined_call_operand.vmem [shape: f32[1,128], index: 4, kind: input, shape index: {}]
  %s5 = inlined_call_operand.vmem [shape: bf16[128,64], index: 5, kind: input, shape index: {}]
  %s6 = inlined_call_operand.vmem [shape: f32[1,64], index: 6, kind: input, shape index: {}]
  %s7 = inlined_call_operand.vmem [shape: bf16[64,128], index: 7, kind: input, shape index: {}]
  %s8 = inlined_call_operand.vmem [shape: f32[1,128], index: 8, kind: input, shape index: {}]
  %s9 = inlined_call_operand.hbm [shape: f32[8,128], index: 9, kind: output, shape index: {}]
  %s10 = sld [smem:[#allocation0]]
  $region54: #{tpu_custom_call.1} parent=0
    _
  %s12 = ssub.s32 1, %s10
  %s13 = scalar_select 0, %s12, %s10
  $region1: #{tpu_custom_call.1} parent=0
    #allocation2 [shape = 'u8[458752]{0}', space=vmem, size = 0x70000, scoped, tag = 'input window, operand 1, single buffered']
    #allocation3 [shape = 's32[1]{0}', space=sflag, size = 0x4, scoped, tag = 'scoped memory for tpu_custom_call.1']
    #allocation4 [shape = 's32[1]{0}', space=sflag, size = 0x4, scoped, tag = 'scoped memory for tpu_custom_call.1']
    #allocation5 [shape = 'u8[65536]{0}', space=vmem, size = 0x10000, scoped, tag = 'input window, operand 3, single buffered']
    #allocation6 [shape = 's32[1]{0}', space=sflag, size = 0x4, scoped, tag = 'scoped memory for tpu_custom_call.1']
    #allocation7 [shape = 'u8[4096]{0}', space=vmem, size = 0x1000, scoped, tag = 'output window, operand 0, single buffered']
    %14 = vsyncpa [#allocation3], 0
    %15 = vsyncpa [#allocation6], 0
    %16 = vsyncpa [#allocation4], 0
    // Predicated region
    $region2: #{tpu_custom_call.1} parent=1 // pred_check
      _
    $region3: #{tpu_custom_call.1} parent=1 // pred_check_branch
      %18 = sbr.rel (0) target = $region5
    $region4: #{tpu_custom_call.1} parent=1 // pred_region
      _
    $region5: #{tpu_custom_call.1} parent=1 // pred_fallthru
      _
    // Predicated region
    $region6: #{tpu_custom_call.1} parent=1 // pred_check
      _
    $region7: #{tpu_custom_call.1} parent=1 // pred_check_branch
      %20 = sbr.rel (0) target = $region9
    $region8: #{tpu_custom_call.1} parent=1 // pred_region
      %s22 = ssub.s32 14336, 14336
      %23 = vsyncadd [#allocation3], %s22
      %s24 = sshll.u32 [#allocation2], 4
      %s25 = int_to_ptr.vmem [resolvable:$true] %s24
      %30 = dma.hbm_to_vmem [thread:$0]  %s1, 14336, %s25, [#allocation3], 128, 128, 8
    $region9: #{tpu_custom_call.1} parent=1 // pred_fallthru
      _
    // Predicated region
    $region10: #{tpu_custom_call.1} parent=1 // pred_check
      _
    $region11: #{tpu_custom_call.1} parent=1 // pred_check_branch
      %32 = sbr.rel (0) target = $region13
    $region12: #{tpu_custom_call.1} parent=1 // pred_region
      _
    $region13: #{tpu_custom_call.1} parent=1 // pred_fallthru
      _
    // Predicated region
    $region14: #{tpu_custom_call.1} parent=1 // pred_check
      _
    $region15: #{tpu_custom_call.1} parent=1 // pred_check_branch
      %34 = sbr.rel (0) target = $region17
    $region16: #{tpu_custom_call.1} parent=1 // pred_region
      %s36 = ssub.s32 2048, 2048
      %37 = vsyncadd [#allocation6], %s36
      %s38 = sshll.u32 [#allocation5], 4
      %s39 = int_to_ptr.vmem [resolvable:$true] %s38
      %44 = dma.hbm_to_vmem [thread:$0]  %s3, 2048, %s39, [#allocation6], 64, 64, 4
    $region17: #{tpu_custom_call.1} parent=1 // pred_fallthru
      _
    // Predicated region
    $region18: #{tpu_custom_call.1} parent=1 // pred_check
      _
    $region19: #{tpu_custom_call.1} parent=1 // pred_check_branch
      %46 = sbr.rel (0) target = $region21
    $region20: #{tpu_custom_call.1} parent=1 // pred_region
      _
    $region21: #{tpu_custom_call.1} parent=1 // pred_fallthru
      _
    // Predicated region
    $region22: #{tpu_custom_call.1} parent=1 // pred_check
      _
    $region23: #{tpu_custom_call.1} parent=1 // pred_check_branch
      %48 = sbr.rel (0) target = $region25
    $region24: #{tpu_custom_call.1} parent=1 // pred_region
      _
    $region25: #{tpu_custom_call.1} parent=1 // pred_fallthru
      _
    // Predicated region
    $region26: #{tpu_custom_call.1} parent=1 // pred_check
      _
    $region27: #{tpu_custom_call.1} parent=1 // pred_check_branch
      %50 = sbr.rel (0) target = $region29
    $region28: #{tpu_custom_call.1} parent=1 // pred_region
      _
    $region29: #{tpu_custom_call.1} parent=1 // pred_fallthru
      _
    // Predicated region
    $region30: #{tpu_custom_call.1} parent=1 // pred_check
      _
    $region31: #{tpu_custom_call.1} parent=1 // pred_check_branch
      %52 = sbr.rel (0) target = $region33
    $region32: #{tpu_custom_call.1} parent=1 // pred_region
      _
    $region33: #{tpu_custom_call.1} parent=1 // pred_fallthru
      _
    // Predicated region
    $region34: #{tpu_custom_call.1} parent=1 // pred_check
      _
    $region35: #{tpu_custom_call.1} parent=1 // pred_check_branch
      %54 = sbr.rel (0) target = $region37
    $region36: #{tpu_custom_call.1} parent=1 // pred_region
      _
    $region37: #{tpu_custom_call.1} parent=1 // pred_fallthru
      _
    // Predicated region
    $region38: #{tpu_custom_call.1} parent=1 // pred_check
      _
    $region39: #{tpu_custom_call.1} parent=1 // pred_check_branch
      %56 = sbr.rel (0) target = $region41
    $region40: #{tpu_custom_call.1} parent=1 // pred_region
      %57 = dma.done [#allocation3], 14336
    $region41: #{tpu_custom_call.1} parent=1 // pred_fallthru
      _
    // Predicated region
    $region42: #{tpu_custom_call.1} parent=1 // pred_check
      _
    $region43: #{tpu_custom_call.1} parent=1 // pred_check_branch
      %59 = sbr.rel (0) target = $region45
    $region44: #{tpu_custom_call.1} parent=1 // pred_region
      %60 = dma.done [#allocation6], 2048
    $region45: #{tpu_custom_call.1} parent=1 // pred_fallthru
      _
    %v62 = vld [vmem:[%s0] sm:$0xff]
    %v63 = vld [vmem:[%s0 + $0x8] sm:$0xff]
    %v64 = vld [vmem:[%s0 + $0x10] sm:$0xff]
    %v65 = vld [vmem:[%s0 + $0x18] sm:$0xf]
    %v66 = vld [vmem:[#allocation2] sm:$0xff]
    %v67 = vld [vmem:[#allocation2 + $0x8] sm:$0xff]
    %v68 = vld [vmem:[#allocation2 + $0x10] sm:$0xff]
    %v69 = vld [vmem:[#allocation2 + $0x18] sm:$0xff]
    %v70 = vld [vmem:[#allocation2 + $0x20] sm:$0xff]
    %v71 = vld [vmem:[#allocation2 + $0x28] sm:$0xff]
    %v72 = vld [vmem:[#allocation2 + $0x30] sm:$0xff]
    %v73 = vld [vmem:[#allocation2 + $0x38] sm:$0xff]
    %v74 = vld [vmem:[#allocation2 + $0x40] sm:$0xff]
    %v75 = vld [vmem:[#allocation2 + $0x48] sm:$0xff]
    %v76 = vld [vmem:[#allocation2 + $0x50] sm:$0xff]
    %v77 = vld [vmem:[#allocation2 + $0x58] sm:$0xff]
    %v78 = vld [vmem:[#allocation2 + $0x60] sm:$0xff]
    %v79 = vld [vmem:[#allocation2 + $0x68] sm:$0xff]
    %v80 = vld [vmem:[#allocation2 + $0x70] sm:$0xff]
    %v81 = vld [vmem:[#allocation2 + $0x78] sm:$0xff]
    %v82 = vld [vmem:[#allocation2 + $0x80] sm:$0xff]
    %v83 = vld [vmem:[#allocation2 + $0x88] sm:$0xff]
    %v84 = vld [vmem:[#allocation2 + $0x90] sm:$0xff]
    %v85 = vld [vmem:[#allocation2 + $0x98] sm:$0xff]
    %v86 = vld [vmem:[#allocation2 + $0xa0] sm:$0xff]
    %v87 = vld [vmem:[#allocation2 + $0xa8] sm:$0xff]
    %v88 = vld [vmem:[#allocation2 + $0xb0] sm:$0xff]
    %v89 = vld [vmem:[#allocation2 + $0xb8] sm:$0xff]
    %v90 = vld [vmem:[#allocation2 + $0xc0] sm:$0xff]
    %v91 = vld [vmem:[#allocation2 + $0xc8] sm:$0xff]
    %v92 = vld [vmem:[#allocation2 + $0xd0] sm:$0xff]
    %v93 = vld [vmem:[#allocation2 + $0xd8] sm:$0xff]
    %v94 = vld [vmem:[#allocation2 + $0xe0] sm:$0xff]
    %v95 = vld [vmem:[#allocation2 + $0xe8] sm:$0xff]
    %v96 = vld [vmem:[#allocation2 + $0xf0] sm:$0xff]
    %v97 = vld [vmem:[#allocation2 + $0xf8] sm:$0xff]
    %v98 = vld [vmem:[#allocation2 + $0x100] sm:$0xff]
    %v99 = vld [vmem:[#allocation2 + $0x108] sm:$0xff]
    %v100 = vld [vmem:[#allocation2 + $0x110] sm:$0xff]
    %v101 = vld [vmem:[#allocation2 + $0x118] sm:$0xff]
    %v102 = vld [vmem:[#allocation2 + $0x120] sm:$0xff]
    %v103 = vld [vmem:[#allocation2 + $0x128] sm:$0xff]
    %v104 = vld [vmem:[#allocation2 + $0x130] sm:$0xff]
    %v105 = vld [vmem:[#allocation2 + $0x138] sm:$0xff]
    %v106 = vld [vmem:[#allocation2 + $0x140] sm:$0xff]
    %v107 = vld [vmem:[#allocation2 + $0x148] sm:$0xff]
    %v108 = vld [vmem:[#allocation2 + $0x150] sm:$0xff]
    %v109 = vld [vmem:[#allocation2 + $0x158] sm:$0xff]
    %v110 = vld [vmem:[#allocation2 + $0x160] sm:$0xff]
    %v111 = vld [vmem:[#allocation2 + $0x168] sm:$0xff]
    %v112 = vld [vmem:[#allocation2 + $0x170] sm:$0xff]
    %v113 = vld [vmem:[#allocation2 + $0x178] sm:$0xff]
    %v114 = vld [vmem:[#allocation2 + $0x180] sm:$0xff]
    %v115 = vld [vmem:[#allocation2 + $0x188] sm:$0xff]
    %v116 = vld [vmem:[#allocation2 + $0x190] sm:$0xff]
    %v117 = vld [vmem:[#allocation2 + $0x198] sm:$0xff]
    %v118 = vld [vmem:[#allocation2 + $0x1a0] sm:$0xff]
    %v119 = vld [vmem:[#allocation2 + $0x1a8] sm:$0xff]
    %v120 = vld [vmem:[#allocation2 + $0x1b0] sm:$0xff]
    %v121 = vld [vmem:[#allocation2 + $0x1b8] sm:$0xff]
    %v122 = vld [vmem:[#allocation2 + $0x1c0] sm:$0xff]
    %v123 = vld [vmem:[#allocation2 + $0x1c8] sm:$0xff]
    %v124 = vld [vmem:[#allocation2 + $0x1d0] sm:$0xff]
    %v125 = vld [vmem:[#allocation2 + $0x1d8] sm:$0xff]
    %v126 = vld [vmem:[#allocation2 + $0x1e0] sm:$0xff]
    %v127 = vld [vmem:[#allocation2 + $0x1e8] sm:$0xff]
    %v128 = vld [vmem:[#allocation2 + $0x1f0] sm:$0xff]
    %v129 = vld [vmem:[#allocation2 + $0x1f8] sm:$0xff]
    %v130 = vld [vmem:[#allocation2 + $0x200] sm:$0xff]
    %v131 = vld [vmem:[#allocation2 + $0x208] sm:$0xff]
    %v132 = vld [vmem:[#allocation2 + $0x210] sm:$0xff]
    %v133 = vld [vmem:[#allocation2 + $0x218] sm:$0xff]
    %v134 = vld [vmem:[#allocation2 + $0x220] sm:$0xff]
    %v135 = vld [vmem:[#allocation2 + $0x228] sm:$0xff]
    %v136 = vld [vmem:[#allocation2 + $0x230] sm:$0xff]
    %v137 = vld [vmem:[#allocation2 + $0x238] sm:$0xff]
    %v138 = vld [vmem:[#allocation2 + $0x240] sm:$0xff]
    %v139 = vld [vmem:[#allocation2 + $0x248] sm:$0xff]
    %v140 = vld [vmem:[#allocation2 + $0x250] sm:$0xff]
    %v141 = vld [vmem:[#allocation2 + $0x258] sm:$0xff]
    %v142 = vld [vmem:[#allocation2 + $0x260] sm:$0xff]
    %v143 = vld [vmem:[#allocation2 + $0x268] sm:$0xff]
    %v144 = vld [vmem:[#allocation2 + $0x270] sm:$0xff]
    %v145 = vld [vmem:[#allocation2 + $0x278] sm:$0xff]
    %v146 = vld [vmem:[#allocation2 + $0x280] sm:$0xff]
    %v147 = vld [vmem:[#allocation2 + $0x288] sm:$0xff]
    %v148 = vld [vmem:[#allocation2 + $0x290] sm:$0xff]
    %v149 = vld [vmem:[#allocation2 + $0x298] sm:$0xff]
    %v150 = vld [vmem:[#allocation2 + $0x2a0] sm:$0xff]
    %v151 = vld [vmem:[#allocation2 + $0x2a8] sm:$0xff]
    %v152 = vld [vmem:[#allocation2 + $0x2b0] sm:$0xff]
    %v153 = vld [vmem:[#allocation2 + $0x2b8] sm:$0xff]
    %v154 = vld [vmem:[#allocation2 + $0x2c0] sm:$0xff]
    %v155 = vld [vmem:[#allocation2 + $0x2c8] sm:$0xff]
    %v156 = vld [vmem:[#allocation2 + $0x2d0] sm:$0xff]
    %v157 = vld [vmem:[#allocation2 + $0x2d8] sm:$0xff]
    %v158 = vld [vmem:[#allocation2 + $0x2e0] sm:$0xff]
    %v159 = vld [vmem:[#allocation2 + $0x2e8] sm:$0xff]
    %v160 = vld [vmem:[#allocation2 + $0x2f0] sm:$0xff]
    %v161 = vld [vmem:[#allocation2 + $0x2f8] sm:$0xff]
    %v162 = vld [vmem:[#allocation2 + $0x300] sm:$0xff]
    %v163 = vld [vmem:[#allocation2 + $0x308] sm:$0xff]
    %v164 = vld [vmem:[#allocation2 + $0x310] sm:$0xff]
    %v165 = vld [vmem:[#allocation2 + $0x318] sm:$0xff]
    %v166 = vld [vmem:[#allocation2 + $0x320] sm:$0xff]
    %v167 = vld [vmem:[#allocation2 + $0x328] sm:$0xff]
    %v168 = vld [vmem:[#allocation2 + $0x330] sm:$0xff]
    %v169 = vld [vmem:[#allocation2 + $0x338] sm:$0xff]
    %v170 = vld [vmem:[#allocation2 + $0x340] sm:$0xff]
    %v171 = vld [vmem:[#allocation2 + $0x348] sm:$0xff]
    %v172 = vld [vmem:[#allocation2 + $0x350] sm:$0xff]
    %v173 = vld [vmem:[#allocation2 + $0x358] sm:$0xff]
    %v174 = vld [vmem:[#allocation2 + $0x360] sm:$0xff]
    %v175 = vld [vmem:[#allocation2 + $0x368] sm:$0xff]
    %v176 = vld [vmem:[#allocation2 + $0x370] sm:$0xff]
    %v177 = vld [vmem:[#allocation2 + $0x378] sm:$0xff]
    %v178 = vld [vmem:[%s2] sm:$0x3]
    %v180 = vlaneseq
    %v181 = vshrl.u32 %v180, 7
    %v182 = vsub.s32 0, %v181
    %v183 = vrot.slane %v178, %v182
    %v184 = vlaneseq
    %v185 = vshrl.u32 %v184, 7
    %v186 = vsub.s32 1, %v185
    %v187 = vrot.slane %v178, %v186
    %v194 = vunpack.c.l.b16 %v62
    %v195 = vunpack.c.h.b16 %v62
    %v196 = vunpack.c.l.b16 %v63
    %v197 = vunpack.c.h.b16 %v63
    %v198 = vunpack.c.l.b16 %v64
    %v199 = vunpack.c.h.b16 %v64
    %v200 = vunpack.c.l.b16 %v65
    %v201 = vpack.c.b16 %v194, %v194
    %v202 = vpack.c.b16 %v195, %v195
    %v203 = vpack.c.b16 %v196, %v196
    %v204 = vpack.c.b16 %v197, %v197
    %v205 = vpack.c.b16 %v198, %v198
    %v206 = vpack.c.b16 %v199, %v199
    %v207 = vpack.c.b16 %v200, %v200
    %v327 = vunpack.c.l.b16 %v66
    %v328 = vunpack.c.h.b16 %v66
    %v329 = vunpack.c.l.b16 %v67
    %v330 = vunpack.c.h.b16 %v67
    %v331 = vunpack.c.l.b16 %v68
    %v332 = vunpack.c.h.b16 %v68
    %v333 = vunpack.c.l.b16 %v69
    %v334 = vunpack.c.h.b16 %v69
    %v335 = vunpack.c.l.b16 %v70
    %v336 = vunpack.c.h.b16 %v70
    %v337 = vunpack.c.l.b16 %v71
    %v338 = vunpack.c.h.b16 %v71
    %v339 = vunpack.c.l.b16 %v72
    %v340 = vunpack.c.h.b16 %v72
    %v341 = vunpack.c.l.b16 %v73
    %v342 = vunpack.c.h.b16 %v73
    %v343 = vunpack.c.l.b16 %v74
    %v344 = vunpack.c.h.b16 %v74
    %v345 = vunpack.c.l.b16 %v75
    %v346 = vunpack.c.h.b16 %v75
    %v347 = vunpack.c.l.b16 %v76
    %v348 = vunpack.c.h.b16 %v76
    %v349 = vunpack.c.l.b16 %v77
    %v350 = vunpack.c.h.b16 %v77
    %v351 = vunpack.c.l.b16 %v78
    %v352 = vunpack.c.h.b16 %v78
    %v353 = vunpack.c.l.b16 %v79
    %v354 = vunpack.c.h.b16 %v79
    %v355 = vunpack.c.l.b16 %v80
    %v356 = vunpack.c.h.b16 %v80
    %v357 = vunpack.c.l.b16 %v81
    %v358 = vunpack.c.h.b16 %v81
    %v359 = vunpack.c.l.b16 %v82
    %v360 = vunpack.c.h.b16 %v82
    %v361 = vunpack.c.l.b16 %v83
    %v362 = vunpack.c.h.b16 %v83
    %v363 = vunpack.c.l.b16 %v84
    %v364 = vunpack.c.h.b16 %v84
    %v365 = vunpack.c.l.b16 %v85
    %v366 = vunpack.c.h.b16 %v85
    %v367 = vunpack.c.l.b16 %v86
    %v368 = vunpack.c.h.b16 %v86
    %v369 = vunpack.c.l.b16 %v87
    %v370 = vunpack.c.h.b16 %v87
    %v371 = vunpack.c.l.b16 %v88
    %v372 = vunpack.c.h.b16 %v88
    %v373 = vunpack.c.l.b16 %v89
    %v374 = vunpack.c.h.b16 %v89
    %v375 = vunpack.c.l.b16 %v90
    %v376 = vunpack.c.h.b16 %v90
    %v377 = vunpack.c.l.b16 %v91
    %v378 = vunpack.c.h.b16 %v91
    %v379 = vunpack.c.l.b16 %v92
    %v380 = vunpack.c.h.b16 %v92
    %v381 = vunpack.c.l.b16 %v93
    %v382 = vunpack.c.h.b16 %v93
    %v383 = vunpack.c.l.b16 %v94
    %v384 = vunpack.c.h.b16 %v94
    %v385 = vunpack.c.l.b16 %v95
    %v386 = vunpack.c.h.b16 %v95
    %v387 = vunpack.c.l.b16 %v96
    %v388 = vunpack.c.h.b16 %v96
    %v389 = vunpack.c.l.b16 %v97
    %v390 = vunpack.c.h.b16 %v97
    %v391 = vunpack.c.l.b16 %v98
    %v392 = vunpack.c.h.b16 %v98
    %v393 = vunpack.c.l.b16 %v99
    %v394 = vunpack.c.h.b16 %v99
    %v395 = vunpack.c.l.b16 %v100
    %v396 = vunpack.c.h.b16 %v100
    %v397 = vunpack.c.l.b16 %v101
    %v398 = vunpack.c.h.b16 %v101
    %v399 = vunpack.c.l.b16 %v102
    %v400 = vunpack.c.h.b16 %v102
    %v401 = vunpack.c.l.b16 %v103
    %v402 = vunpack.c.h.b16 %v103
    %v403 = vunpack.c.l.b16 %v104
    %v404 = vunpack.c.h.b16 %v104
    %v405 = vunpack.c.l.b16 %v105
    %v406 = vunpack.c.h.b16 %v105
    %v407 = vunpack.c.l.b16 %v106
    %v408 = vunpack.c.h.b16 %v106
    %v409 = vunpack.c.l.b16 %v107
    %v410 = vunpack.c.h.b16 %v107
    %v411 = vunpack.c.l.b16 %v108
    %v412 = vunpack.c.h.b16 %v108
    %v413 = vunpack.c.l.b16 %v109
    %v414 = vunpack.c.h.b16 %v109
    %v415 = vunpack.c.l.b16 %v110
    %v416 = vunpack.c.h.b16 %v110
    %v417 = vunpack.c.l.b16 %v111
    %v418 = vunpack.c.h.b16 %v111
    %v419 = vunpack.c.l.b16 %v112
    %v420 = vunpack.c.h.b16 %v112
    %v421 = vunpack.c.l.b16 %v113
    %v422 = vunpack.c.h.b16 %v113
    %v423 = vunpack.c.l.b16 %v114
    %v424 = vunpack.c.h.b16 %v114
    %v425 = vunpack.c.l.b16 %v115
    %v426 = vunpack.c.h.b16 %v115
    %v427 = vunpack.c.l.b16 %v116
    %v428 = vunpack.c.h.b16 %v116
    %v429 = vunpack.c.l.b16 %v117
    %v430 = vunpack.c.h.b16 %v117
    %v431 = vunpack.c.l.b16 %v118
    %v432 = vunpack.c.h.b16 %v118
    %v433 = vunpack.c.l.b16 %v119
    %v434 = vunpack.c.h.b16 %v119
    %v435 = vunpack.c.l.b16 %v120
    %v436 = vunpack.c.h.b16 %v120
    %v437 = vunpack.c.l.b16 %v121
    %v438 = vunpack.c.h.b16 %v121
    %v439 = vunpack.c.l.b16 %v122
    %v440 = vunpack.c.h.b16 %v122
    %v441 = vunpack.c.l.b16 %v123
    %v442 = vunpack.c.h.b16 %v123
    %v443 = vunpack.c.l.b16 %v124
    %v444 = vunpack.c.h.b16 %v124
    %v445 = vunpack.c.l.b16 %v125
    %v446 = vunpack.c.h.b16 %v125
    %v447 = vunpack.c.l.b16 %v126
    %v448 = vunpack.c.h.b16 %v126
    %v449 = vunpack.c.l.b16 %v127
    %v450 = vunpack.c.h.b16 %v127
    %v451 = vunpack.c.l.b16 %v128
    %v452 = vunpack.c.h.b16 %v128
    %v453 = vunpack.c.l.b16 %v129
    %v454 = vunpack.c.h.b16 %v129
    %v455 = vunpack.c.l.b16 %v130
    %v456 = vunpack.c.h.b16 %v130
    %v457 = vunpack.c.l.b16 %v131
    %v458 = vunpack.c.h.b16 %v131
    %v459 = vunpack.c.l.b16 %v132
    %v460 = vunpack.c.h.b16 %v132
    %v461 = vunpack.c.l.b16 %v133
    %v462 = vunpack.c.h.b16 %v133
    %v463 = vunpack.c.l.b16 %v134
    %v464 = vunpack.c.h.b16 %v134
    %v465 = vunpack.c.l.b16 %v135
    %v466 = vunpack.c.h.b16 %v135
    %v467 = vunpack.c.l.b16 %v136
    %v468 = vunpack.c.h.b16 %v136
    %v469 = vunpack.c.l.b16 %v137
    %v470 = vunpack.c.h.b16 %v137
    %v471 = vunpack.c.l.b16 %v138
    %v472 = vunpack.c.h.b16 %v138
    %v473 = vunpack.c.l.b16 %v139
    %v474 = vunpack.c.h.b16 %v139
    %v475 = vunpack.c.l.b16 %v140
    %v476 = vunpack.c.h.b16 %v140
    %v477 = vunpack.c.l.b16 %v141
    %v478 = vunpack.c.h.b16 %v141
    %v479 = vunpack.c.l.b16 %v142
    %v480 = vunpack.c.h.b16 %v142
    %v481 = vunpack.c.l.b16 %v143
    %v482 = vunpack.c.h.b16 %v143
    %v483 = vunpack.c.l.b16 %v144
    %v484 = vunpack.c.h.b16 %v144
    %v485 = vunpack.c.l.b16 %v145
    %v486 = vunpack.c.h.b16 %v145
    %v487 = vunpack.c.l.b16 %v146
    %v488 = vunpack.c.h.b16 %v146
    %v489 = vunpack.c.l.b16 %v147
    %v490 = vunpack.c.h.b16 %v147
    %v491 = vunpack.c.l.b16 %v148
    %v492 = vunpack.c.h.b16 %v148
    %v493 = vunpack.c.l.b16 %v149
    %v494 = vunpack.c.h.b16 %v149
    %v495 = vunpack.c.l.b16 %v150
    %v496 = vunpack.c.h.b16 %v150
    %v497 = vunpack.c.l.b16 %v151
    %v498 = vunpack.c.h.b16 %v151
    %v499 = vunpack.c.l.b16 %v152
    %v500 = vunpack.c.h.b16 %v152
    %v501 = vunpack.c.l.b16 %v153
    %v502 = vunpack.c.h.b16 %v153
    %v503 = vunpack.c.l.b16 %v154
    %v504 = vunpack.c.h.b16 %v154
    %v505 = vunpack.c.l.b16 %v155
    %v506 = vunpack.c.h.b16 %v155
    %v507 = vunpack.c.l.b16 %v156
    %v508 = vunpack.c.h.b16 %v156
    %v509 = vunpack.c.l.b16 %v157
    %v510 = vunpack.c.h.b16 %v157
    %v511 = vunpack.c.l.b16 %v158
    %v512 = vunpack.c.h.b16 %v158
    %v513 = vunpack.c.l.b16 %v159
    %v514 = vunpack.c.h.b16 %v159
    %v515 = vunpack.c.l.b16 %v160
    %v516 = vunpack.c.h.b16 %v160
    %v517 = vunpack.c.l.b16 %v161
    %v518 = vunpack.c.h.b16 %v161
    %v519 = vunpack.c.l.b16 %v162
    %v520 = vunpack.c.h.b16 %v162
    %v521 = vunpack.c.l.b16 %v163
    %v522 = vunpack.c.h.b16 %v163
    %v523 = vunpack.c.l.b16 %v164
    %v524 = vunpack.c.h.b16 %v164
    %v525 = vunpack.c.l.b16 %v165
    %v526 = vunpack.c.h.b16 %v165
    %v527 = vunpack.c.l.b16 %v166
    %v528 = vunpack.c.h.b16 %v166
    %v529 = vunpack.c.l.b16 %v167
    %v530 = vunpack.c.h.b16 %v167
    %v531 = vunpack.c.l.b16 %v168
    %v532 = vunpack.c.h.b16 %v168
    %v533 = vunpack.c.l.b16 %v169
    %v534 = vunpack.c.h.b16 %v169
    %v535 = vunpack.c.l.b16 %v170
    %v536 = vunpack.c.h.b16 %v170
    %v537 = vunpack.c.l.b16 %v171
    %v538 = vunpack.c.h.b16 %v171
    %v539 = vunpack.c.l.b16 %v172
    %v540 = vunpack.c.h.b16 %v172
    %v541 = vunpack.c.l.b16 %v173
    %v542 = vunpack.c.h.b16 %v173
    %v543 = vunpack.c.l.b16 %v174
    %v544 = vunpack.c.h.b16 %v174
    %v545 = vunpack.c.l.b16 %v175
    %v546 = vunpack.c.h.b16 %v175
    %v547 = vunpack.c.l.b16 %v176
    %v548 = vunpack.c.h.b16 %v176
    %v549 = vunpack.c.l.b16 %v177
    %v550 = vunpack.c.h.b16 %v177
    %v551 = vpack.c.b16 %v329, %v327
    %v552 = vpack.c.b16 %v330, %v328
    %v553 = vpack.c.b16 %v333, %v331
    %v554 = vpack.c.b16 %v334, %v332
    %v555 = vpack.c.b16 %v337, %v335
    %v556 = vpack.c.b16 %v338, %v336
    %v557 = vpack.c.b16 %v341, %v339
    %v558 = vpack.c.b16 %v342, %v340
    %v559 = vpack.c.b16 %v345, %v343
    %v560 = vpack.c.b16 %v346, %v344
    %v561 = vpack.c.b16 %v349, %v347
    %v562 = vpack.c.b16 %v350, %v348
    %v563 = vpack.c.b16 %v353, %v351
    %v564 = vpack.c.b16 %v354, %v352
    %v565 = vpack.c.b16 %v357, %v355
    %v566 = vpack.c.b16 %v358, %v356
    %v567 = vpack.c.b16 %v361, %v359
    %v568 = vpack.c.b16 %v362, %v360
    %v569 = vpack.c.b16 %v365, %v363
    %v570 = vpack.c.b16 %v366, %v364
    %v571 = vpack.c.b16 %v369, %v367
    %v572 = vpack.c.b16 %v370, %v368
    %v573 = vpack.c.b16 %v373, %v371
    %v574 = vpack.c.b16 %v374, %v372
    %v575 = vpack.c.b16 %v377, %v375
    %v576 = vpack.c.b16 %v378, %v376
    %v577 = vpack.c.b16 %v381, %v379
    %v578 = vpack.c.b16 %v382, %v380
    %v579 = vpack.c.b16 %v385, %v383
    %v580 = vpack.c.b16 %v386, %v384
    %v581 = vpack.c.b16 %v389, %v387
    %v582 = vpack.c.b16 %v390, %v388
    %v583 = vpack.c.b16 %v393, %v391
    %v584 = vpack.c.b16 %v394, %v392
    %v585 = vpack.c.b16 %v397, %v395
    %v586 = vpack.c.b16 %v398, %v396
    %v587 = vpack.c.b16 %v401, %v399
    %v588 = vpack.c.b16 %v402, %v400
    %v589 = vpack.c.b16 %v405, %v403
    %v590 = vpack.c.b16 %v406, %v404
    %v591 = vpack.c.b16 %v409, %v407
    %v592 = vpack.c.b16 %v410, %v408
    %v593 = vpack.c.b16 %v413, %v411
    %v594 = vpack.c.b16 %v414, %v412
    %v595 = vpack.c.b16 %v417, %v415
    %v596 = vpack.c.b16 %v418, %v416
    %v597 = vpack.c.b16 %v421, %v419
    %v598 = vpack.c.b16 %v422, %v420
    %v599 = vpack.c.b16 %v425, %v423
    %v600 = vpack.c.b16 %v426, %v424
    %v601 = vpack.c.b16 %v429, %v427
    %v602 = vpack.c.b16 %v430, %v428
    %v603 = vpack.c.b16 %v433, %v431
    %v604 = vpack.c.b16 %v434, %v432
    %v605 = vpack.c.b16 %v437, %v435
    %v606 = vpack.c.b16 %v438, %v436
    %v607 = vpack.c.b16 %v441, %v439
    %v608 = vpack.c.b16 %v442, %v440
    %v609 = vpack.c.b16 %v445, %v443
    %v610 = vpack.c.b16 %v446, %v444
    %v611 = vpack.c.b16 %v449, %v447
    %v612 = vpack.c.b16 %v450, %v448
    %v613 = vpack.c.b16 %v453, %v451
    %v614 = vpack.c.b16 %v454, %v452
    %v615 = vpack.c.b16 %v457, %v455
    %v616 = vpack.c.b16 %v458, %v456
    %v617 = vpack.c.b16 %v461, %v459
    %v618 = vpack.c.b16 %v462, %v460
    %v619 = vpack.c.b16 %v465, %v463
    %v620 = vpack.c.b16 %v466, %v464
    %v621 = vpack.c.b16 %v469, %v467
    %v622 = vpack.c.b16 %v470, %v468
    %v623 = vpack.c.b16 %v473, %v471
    %v624 = vpack.c.b16 %v474, %v472
    %v625 = vpack.c.b16 %v477, %v475
    %v626 = vpack.c.b16 %v478, %v476
    %v627 = vpack.c.b16 %v481, %v479
    %v628 = vpack.c.b16 %v482, %v480
    %v629 = vpack.c.b16 %v485, %v483
    %v630 = vpack.c.b16 %v486, %v484
    %v631 = vpack.c.b16 %v489, %v487
    %v632 = vpack.c.b16 %v490, %v488
    %v633 = vpack.c.b16 %v493, %v491
    %v634 = vpack.c.b16 %v494, %v492
    %v635 = vpack.c.b16 %v497, %v495
    %v636 = vpack.c.b16 %v498, %v496
    %v637 = vpack.c.b16 %v501, %v499
    %v638 = vpack.c.b16 %v502, %v500
    %v639 = vpack.c.b16 %v505, %v503
    %v640 = vpack.c.b16 %v506, %v504
    %v641 = vpack.c.b16 %v509, %v507
    %v642 = vpack.c.b16 %v510, %v508
    %v643 = vpack.c.b16 %v513, %v511
    %v644 = vpack.c.b16 %v514, %v512
    %v645 = vpack.c.b16 %v517, %v515
    %v646 = vpack.c.b16 %v518, %v516
    %v647 = vpack.c.b16 %v521, %v519
    %v648 = vpack.c.b16 %v522, %v520
    %v649 = vpack.c.b16 %v525, %v523
    %v650 = vpack.c.b16 %v526, %v524
    %v651 = vpack.c.b16 %v529, %v527
    %v652 = vpack.c.b16 %v530, %v528
    %v653 = vpack.c.b16 %v533, %v531
    %v654 = vpack.c.b16 %v534, %v532
    %v655 = vpack.c.b16 %v537, %v535
    %v656 = vpack.c.b16 %v538, %v536
    %v657 = vpack.c.b16 %v541, %v539
    %v658 = vpack.c.b16 %v542, %v540
    %v659 = vpack.c.b16 %v545, %v543
    %v660 = vpack.c.b16 %v546, %v544
    %v661 = vpack.c.b16 %v549, %v547
    %v662 = vpack.c.b16 %v550, %v548
    %775 = vmatprep.subr.bf16.mxu0 %v552
    %776 = vmatpush1.bf16.msra.mxu0 %v551
    %777 = vmatprep.subr.bf16.mxu0 %v554
    %778 = vmatpush1.bf16.msra.mxu0 %v553
    %779 = vmatprep.subr.bf16.mxu0 %v556
    %780 = vmatpush1.bf16.msra.mxu0 %v555
    %781 = vmatprep.subr.bf16.mxu0 %v558
    %782 = vmatpush1.bf16.msra.mxu0 %v557
    %783 = vmatprep.subr.bf16.mxu0 %v560
    %784 = vmatpush1.bf16.msra.mxu0 %v559
    %785 = vmatprep.subr.bf16.mxu0 %v562
    %786 = vmatpush1.bf16.msra.mxu0 %v561
    %787 = vmatprep.subr.bf16.mxu0 %v564
    %788 = vmatpush1.bf16.msra.mxu0 %v563
    %789 = vmatprep.subr.bf16.mxu0 %v566
    %790 = vmatpush1.bf16.msra.mxu0 %v565
    %791 = vmatprep.subr.bf16.mxu0 %v568
    %792 = vmatpush1.bf16.msra.mxu0 %v567
    %793 = vmatprep.subr.bf16.mxu0 %v570
    %794 = vmatpush1.bf16.msra.mxu0 %v569
    %795 = vmatprep.subr.bf16.mxu0 %v572
    %796 = vmatpush1.bf16.msra.mxu0 %v571
    %797 = vmatprep.subr.bf16.mxu0 %v574
    %798 = vmatpush1.bf16.msra.mxu0 %v573
    %799 = vmatprep.subr.bf16.mxu0 %v576
    %800 = vmatpush1.bf16.msra.mxu0 %v575
    %801 = vmatprep.subr.bf16.mxu0 %v578
    %802 = vmatpush1.bf16.msra.mxu0 %v577
    %803 = vmatprep.subr.bf16.mxu0 %v580
    %804 = vmatpush1.bf16.msra.mxu0 %v579
    %805 = vmatprep.subr.bf16.mxu0 %v582
    %806 = vmatpush1.bf16.msra.mxu0 %v581
    %807 = vmatprep.mubr.bf16.mxu0 %v202
    %808 = vmatmul.mubr.bf16.gmra.mrb[0].mxu0 %v201
    %v809 = vpop.f32.mrb[0].mxu0
    %v810 = vadd.f32 %v183, %v809
    %v811 = vpop.f32.mrb[0].mxu0
    %v812 = vadd.f32 %v187, %v811
    %v813 = vpop.f32.mrb[0].mxu0
    %v814 = vpop.f32.mrb[0].mxu0
    %815 = vdwg.mxu0
    %816 = vmatprep.subr.bf16.mxu0 %v584
    %817 = vmatpush1.bf16.msra.mxu0 %v583
    %818 = vmatprep.subr.bf16.mxu0 %v586
    %819 = vmatpush1.bf16.msra.mxu0 %v585
    %820 = vmatprep.subr.bf16.mxu0 %v588
    %821 = vmatpush1.bf16.msra.mxu0 %v587
    %822 = vmatprep.subr.bf16.mxu0 %v590
    %823 = vmatpush1.bf16.msra.mxu0 %v589
    %824 = vmatprep.subr.bf16.mxu0 %v592
    %825 = vmatpush1.bf16.msra.mxu0 %v591
    %826 = vmatprep.subr.bf16.mxu0 %v594
    %827 = vmatpush1.bf16.msra.mxu0 %v593
    %828 = vmatprep.subr.bf16.mxu0 %v596
    %829 = vmatpush1.bf16.msra.mxu0 %v595
    %830 = vmatprep.subr.bf16.mxu0 %v598
    %831 = vmatpush1.bf16.msra.mxu0 %v597
    %832 = vmatprep.subr.bf16.mxu0 %v600
    %833 = vmatpush1.bf16.msra.mxu0 %v599
    %834 = vmatprep.subr.bf16.mxu0 %v602
    %835 = vmatpush1.bf16.msra.mxu0 %v601
    %836 = vmatprep.subr.bf16.mxu0 %v604
    %837 = vmatpush1.bf16.msra.mxu0 %v603
    %838 = vmatprep.subr.bf16.mxu0 %v606
    %839 = vmatpush1.bf16.msra.mxu0 %v605
    %840 = vmatprep.subr.bf16.mxu0 %v608
    %841 = vmatpush1.bf16.msra.mxu0 %v607
    %842 = vmatprep.subr.bf16.mxu0 %v610
    %843 = vmatpush1.bf16.msra.mxu0 %v609
    %844 = vmatprep.subr.bf16.mxu0 %v612
    %845 = vmatpush1.bf16.msra.mxu0 %v611
    %846 = vmatprep.subr.bf16.mxu0 %v614
    %847 = vmatpush1.bf16.msra.mxu0 %v613
    %848 = vmatprep.mubr.bf16.mxu0 %v204
    %849 = vmatmul.mubr.bf16.gmra.mrb[0].mxu0 %v203
    %v850 = vpop.f32.mrb[0].mxu0
    %v851 = vadd.f32 %v810, %v850
    %v852 = vpop.f32.mrb[0].mxu0
    %v853 = vadd.f32 %v812, %v852
    %v854 = vpop.f32.mrb[0].mxu0
    %v855 = vpop.f32.mrb[0].mxu0
    %856 = vdwg.mxu0
    %857 = vmatprep.subr.bf16.mxu0 %v616
    %858 = vmatpush1.bf16.msra.mxu0 %v615
    %859 = vmatprep.subr.bf16.mxu0 %v618
    %860 = vmatpush1.bf16.msra.mxu0 %v617
    %861 = vmatprep.subr.bf16.mxu0 %v620
    %862 = vmatpush1.bf16.msra.mxu0 %v619
    %863 = vmatprep.subr.bf16.mxu0 %v622
    %864 = vmatpush1.bf16.msra.mxu0 %v621
    %865 = vmatprep.subr.bf16.mxu0 %v624
    %866 = vmatpush1.bf16.msra.mxu0 %v623
    %867 = vmatprep.subr.bf16.mxu0 %v626
    %868 = vmatpush1.bf16.msra.mxu0 %v625
    %869 = vmatprep.subr.bf16.mxu0 %v628
    %870 = vmatpush1.bf16.msra.mxu0 %v627
    %871 = vmatprep.subr.bf16.mxu0 %v630
    %872 = vmatpush1.bf16.msra.mxu0 %v629
    %873 = vmatprep.subr.bf16.mxu0 %v632
    %874 = vmatpush1.bf16.msra.mxu0 %v631
    %875 = vmatprep.subr.bf16.mxu0 %v634
    %876 = vmatpush1.bf16.msra.mxu0 %v633
    %877 = vmatprep.subr.bf16.mxu0 %v636
    %878 = vmatpush1.bf16.msra.mxu0 %v635
    %879 = vmatprep.subr.bf16.mxu0 %v638
    %880 = vmatpush1.bf16.msra.mxu0 %v637
    %881 = vmatprep.subr.bf16.mxu0 %v640
    %882 = vmatpush1.bf16.msra.mxu0 %v639
    %883 = vmatprep.subr.bf16.mxu0 %v642
    %884 = vmatpush1.bf16.msra.mxu0 %v641
    %885 = vmatprep.subr.bf16.mxu0 %v644
    %886 = vmatpush1.bf16.msra.mxu0 %v643
    %887 = vmatprep.subr.bf16.mxu0 %v646
    %888 = vmatpush1.bf16.msra.mxu0 %v645
    %889 = vmatprep.mubr.bf16.mxu0 %v206
    %890 = vmatmul.mubr.bf16.gmra.mrb[0].mxu0 %v205
    %v891 = vpop.f32.mrb[0].mxu0
    %v892 = vadd.f32 %v851, %v891
    %v893 = vpop.f32.mrb[0].mxu0
    %v894 = vadd.f32 %v853, %v893
    %v895 = vpop.f32.mrb[0].mxu0
    %v896 = vpop.f32.mrb[0].mxu0
    %897 = vdwg.mxu0
    %898 = vmatprep.subr.bf16.mxu0 %v648
    %899 = vmatpush1.bf16.msra.mxu0 %v647
    %900 = vmatprep.subr.bf16.mxu0 %v650
    %901 = vmatpush1.bf16.msra.mxu0 %v649
    %902 = vmatprep.subr.bf16.mxu0 %v652
    %903 = vmatpush1.bf16.msra.mxu0 %v651
    %904 = vmatprep.subr.bf16.mxu0 %v654
    %905 = vmatpush1.bf16.msra.mxu0 %v653
    %906 = vmatprep.subr.bf16.mxu0 %v656
    %907 = vmatpush1.bf16.msra.mxu0 %v655
    %908 = vmatprep.subr.bf16.mxu0 %v658
    %909 = vmatpush1.bf16.msra.mxu0 %v657
    %910 = vmatprep.subr.bf16.mxu0 %v660
    %911 = vmatpush1.bf16.msra.mxu0 %v659
    %912 = vmatprep.subr.bf16.mxu0 %v662
    %913 = vmatpush1.bf16.msra.mxu0 %v661
    %914 = vmatprep.subr.bf16.mxu0 0
    %915 = vmatpush1.bf16.msra.mxu0 0
    %916 = vmatprep.subr.bf16.mxu0 0
    %917 = vmatpush1.bf16.msra.mxu0 0
    %918 = vmatprep.subr.bf16.mxu0 0
    %919 = vmatpush1.bf16.msra.mxu0 0
    %920 = vmatprep.subr.bf16.mxu0 0
    %921 = vmatpush1.bf16.msra.mxu0 0
    %922 = vmatprep.subr.bf16.mxu0 0
    %923 = vmatpush1.bf16.msra.mxu0 0
    %924 = vmatprep.subr.bf16.mxu0 0
    %925 = vmatpush1.bf16.msra.mxu0 0
    %926 = vmatprep.subr.bf16.mxu0 0
    %927 = vmatpush1.bf16.msra.mxu0 0
    %928 = vmatprep.subr.bf16.mxu0 0
    %929 = vmatpush1.bf16.msra.mxu0 0
    %930 = vmatprep.mubr.bf16.mxu0 0
    %931 = vmatmul.mubr.bf16.gmra.mrb[0].mxu0 %v207
    %v932 = vpop.f32.mrb[0].mxu0
    %v933 = vadd.f32 %v892, %v932
    %v934 = vpop.f32.mrb[0].mxu0
    %v935 = vadd.f32 %v894, %v934
    %v936 = vpop.f32.mrb[0].mxu0
    %v937 = vpop.f32.mrb[0].mxu0
    %938 = vdwg.mxu0
    %v939 = vmax.f32 %v933, 0.0
    %v940 = vmax.f32 %v935, 0.0
    %v941 = vpack.c.bf16 %v939, %v939
    %v942 = vpack.c.bf16 %v940, %v940
    %v943 = vld [vmem:[#allocation5] sm:$0xf]
    %v944 = vld [vmem:[#allocation5 + $0x4] sm:$0xf]
    %v945 = vld [vmem:[#allocation5 + $0x8] sm:$0xf]
    %v946 = vld [vmem:[#allocation5 + $0xc] sm:$0xf]
    %v947 = vld [vmem:[#allocation5 + $0x10] sm:$0xf]
    %v948 = vld [vmem:[#allocation5 + $0x14] sm:$0xf]
    %v949 = vld [vmem:[#allocation5 + $0x18] sm:$0xf]
    %v950 = vld [vmem:[#allocation5 + $0x1c] sm:$0xf]
    %v951 = vld [vmem:[#allocation5 + $0x20] sm:$0xf]
    %v952 = vld [vmem:[#allocation5 + $0x24] sm:$0xf]
    %v953 = vld [vmem:[#allocation5 + $0x28] sm:$0xf]
    %v954 = vld [vmem:[#allocation5 + $0x2c] sm:$0xf]
    %v955 = vld [vmem:[#allocation5 + $0x30] sm:$0xf]
    %v956 = vld [vmem:[#allocation5 + $0x34] sm:$0xf]
    %v957 = vld [vmem:[#allocation5 + $0x38] sm:$0xf]
    %v958 = vld [vmem:[#allocation5 + $0x3c] sm:$0xf]
    %v959 = vld [vmem:[#allocation5 + $0x40] sm:$0xf]
    %v960 = vld [vmem:[#allocation5 + $0x44] sm:$0xf]
    %v961 = vld [vmem:[#allocation5 + $0x48] sm:$0xf]
    %v962 = vld [vmem:[#allocation5 + $0x4c] sm:$0xf]
    %v963 = vld [vmem:[#allocation5 + $0x50] sm:$0xf]
    %v964 = vld [vmem:[#allocation5 + $0x54] sm:$0xf]
    %v965 = vld [vmem:[#allocation5 + $0x58] sm:$0xf]
    %v966 = vld [vmem:[#allocation5 + $0x5c] sm:$0xf]
    %v967 = vld [vmem:[#allocation5 + $0x60] sm:$0xf]
    %v968 = vld [vmem:[#allocation5 + $0x64] sm:$0xf]
    %v969 = vld [vmem:[#allocation5 + $0x68] sm:$0xf]
    %v970 = vld [vmem:[#allocation5 + $0x6c] sm:$0xf]
    %v971 = vld [vmem:[#allocation5 + $0x70] sm:$0xf]
    %v972 = vld [vmem:[#allocation5 + $0x74] sm:$0xf]
    %v973 = vld [vmem:[#allocation5 + $0x78] sm:$0xf]
    %v974 = vld [vmem:[#allocation5 + $0x7c] sm:$0xf]
    %v975 = vld [vmem:[%s4] sm:$0x1]
    %v977 = vlaneseq
    %v978 = vshrl.u32 %v977, 7
    %v979 = vsub.s32 0, %v978
    %v980 = vrot.slane %v975, %v979
    %v1014 = vunpack.c.l.b16 %v943
    %v1015 = vunpack.c.l.b16 %v944
    %v1016 = vunpack.c.l.b16 %v945
    %v1017 = vunpack.c.l.b16 %v946
    %v1018 = vunpack.c.l.b16 %v947
    %v1019 = vunpack.c.l.b16 %v948
    %v1020 = vunpack.c.l.b16 %v949
    %v1021 = vunpack.c.l.b16 %v950
    %v1022 = vunpack.c.l.b16 %v951
    %v1023 = vunpack.c.l.b16 %v952
    %v1024 = vunpack.c.l.b16 %v953
    %v1025 = vunpack.c.l.b16 %v954
    %v1026 = vunpack.c.l.b16 %v955
    %v1027 = vunpack.c.l.b16 %v956
    %v1028 = vunpack.c.l.b16 %v957
    %v1029 = vunpack.c.l.b16 %v958
    %v1030 = vunpack.c.l.b16 %v959
    %v1031 = vunpack.c.l.b16 %v960
    %v1032 = vunpack.c.l.b16 %v961
    %v1033 = vunpack.c.l.b16 %v962
    %v1034 = vunpack.c.l.b16 %v963
    %v1035 = vunpack.c.l.b16 %v964
    %v1036 = vunpack.c.l.b16 %v965
    %v1037 = vunpack.c.l.b16 %v966
    %v1038 = vunpack.c.l.b16 %v967
    %v1039 = vunpack.c.l.b16 %v968
    %v1040 = vunpack.c.l.b16 %v969
    %v1041 = vunpack.c.l.b16 %v970
    %v1042 = vunpack.c.l.b16 %v971
    %v1043 = vunpack.c.l.b16 %v972
    %v1044 = vunpack.c.l.b16 %v973
    %v1045 = vunpack.c.l.b16 %v974
    %v1046 = vpack.c.b16 %v1015, %v1014
    %v1047 = vpack.c.b16 %v1017, %v1016
    %v1048 = vpack.c.b16 %v1019, %v1018
    %v1049 = vpack.c.b16 %v1021, %v1020
    %v1050 = vpack.c.b16 %v1023, %v1022
    %v1051 = vpack.c.b16 %v1025, %v1024
    %v1052 = vpack.c.b16 %v1027, %v1026
    %v1053 = vpack.c.b16 %v1029, %v1028
    %v1054 = vpack.c.b16 %v1031, %v1030
    %v1055 = vpack.c.b16 %v1033, %v1032
    %v1056 = vpack.c.b16 %v1035, %v1034
    %v1057 = vpack.c.b16 %v1037, %v1036
    %v1058 = vpack.c.b16 %v1039, %v1038
    %v1059 = vpack.c.b16 %v1041, %v1040
    %v1060 = vpack.c.b16 %v1043, %v1042
    %v1061 = vpack.c.b16 %v1045, %v1044
    %1078 = vmatprep.subr.bf16.mxu0 0
    %1079 = vmatpush1.bf16.msra.mxu0 %v1046
    %1080 = vmatprep.subr.bf16.mxu0 0
    %1081 = vmatpush1.bf16.msra.mxu0 %v1047
    %1082 = vmatprep.subr.bf16.mxu0 0
    %1083 = vmatpush1.bf16.msra.mxu0 %v1048
    %1084 = vmatprep.subr.bf16.mxu0 0
    %1085 = vmatpush1.bf16.msra.mxu0 %v1049
    %1086 = vmatprep.subr.bf16.mxu0 0
    %1087 = vmatpush1.bf16.msra.mxu0 %v1050
    %1088 = vmatprep.subr.bf16.mxu0 0
    %1089 = vmatpush1.bf16.msra.mxu0 %v1051
    %1090 = vmatprep.subr.bf16.mxu0 0
    %1091 = vmatpush1.bf16.msra.mxu0 %v1052
    %1092 = vmatprep.subr.bf16.mxu0 0
    %1093 = vmatpush1.bf16.msra.mxu0 %v1053
    %1094 = vmatprep.subr.bf16.mxu0 0
    %1095 = vmatpush1.bf16.msra.mxu0 %v1054
    %1096 = vmatprep.subr.bf16.mxu0 0
    %1097 = vmatpush1.bf16.msra.mxu0 %v1055
    %1098 = vmatprep.subr.bf16.mxu0 0
    %1099 = vmatpush1.bf16.msra.mxu0 %v1056
    %1100 = vmatprep.subr.bf16.mxu0 0
    %1101 = vmatpush1.bf16.msra.mxu0 %v1057
    %1102 = vmatprep.subr.bf16.mxu0 0
    %1103 = vmatpush1.bf16.msra.mxu0 %v1058
    %1104 = vmatprep.subr.bf16.mxu0 0
    %1105 = vmatpush1.bf16.msra.mxu0 %v1059
    %1106 = vmatprep.subr.bf16.mxu0 0
    %1107 = vmatpush1.bf16.msra.mxu0 %v1060
    %1108 = vmatprep.subr.bf16.mxu0 0
    %1109 = vmatpush1.bf16.msra.mxu0 %v1061
    %1110 = vmatprep.mubr.bf16.mxu0 %v942
    %1111 = vmatmul.mubr.bf16.gmra.mrb[0].mxu0 %v941
    %v1112 = vpop.f32.mrb[0].mxu0
    %v1113 = vadd.f32 %v980, %v1112
    %v1114 = vpop.f32.mrb[0].mxu0
    %v1115 = vpop.f32.mrb[0].mxu0
    %v1116 = vpop.f32.mrb[0].mxu0
    %1117 = vdwg.mxu0
    %v1118 = vmax.f32 %v1113, 0.0
    %v1119 = vpack.c.bf16 %v1118, %v1118
    %v1120 = vld [vmem:[%s5] sm:$0xf]
    %v1121 = vld [vmem:[%s5 + $0x4] sm:$0xf]
    %v1122 = vld [vmem:[%s5 + $0x8] sm:$0xf]
    %v1123 = vld [vmem:[%s5 + $0xc] sm:$0xf]
    %v1124 = vld [vmem:[%s5 + $0x10] sm:$0xf]
    %v1125 = vld [vmem:[%s5 + $0x14] sm:$0xf]
    %v1126 = vld [vmem:[%s5 + $0x18] sm:$0xf]
    %v1127 = vld [vmem:[%s5 + $0x1c] sm:$0xf]
    %v1128 = vld [vmem:[%s5 + $0x20] sm:$0xf]
    %v1129 = vld [vmem:[%s5 + $0x24] sm:$0xf]
    %v1130 = vld [vmem:[%s5 + $0x28] sm:$0xf]
    %v1131 = vld [vmem:[%s5 + $0x2c] sm:$0xf]
    %v1132 = vld [vmem:[%s5 + $0x30] sm:$0xf]
    %v1133 = vld [vmem:[%s5 + $0x34] sm:$0xf]
    %v1134 = vld [vmem:[%s5 + $0x38] sm:$0xf]
    %v1135 = vld [vmem:[%s5 + $0x3c] sm:$0xf]
    %v1136 = vld [vmem:[%s6] sm:$0x1]
    %v1138 = vlaneseq
    %v1139 = vshrl.u32 %v1138, 7
    %v1140 = vsub.s32 0, %v1139
    %v1141 = vrot.slane %v1136, %v1140
    %v1159 = vunpack.c.l.b16 %v1120
    %v1160 = vunpack.c.l.b16 %v1121
    %v1161 = vunpack.c.l.b16 %v1122
    %v1162 = vunpack.c.l.b16 %v1123
    %v1163 = vunpack.c.l.b16 %v1124
    %v1164 = vunpack.c.l.b16 %v1125
    %v1165 = vunpack.c.l.b16 %v1126
    %v1166 = vunpack.c.l.b16 %v1127
    %v1167 = vunpack.c.l.b16 %v1128
    %v1168 = vunpack.c.l.b16 %v1129
    %v1169 = vunpack.c.l.b16 %v1130
    %v1170 = vunpack.c.l.b16 %v1131
    %v1171 = vunpack.c.l.b16 %v1132
    %v1172 = vunpack.c.l.b16 %v1133
    %v1173 = vunpack.c.l.b16 %v1134
    %v1174 = vunpack.c.l.b16 %v1135
    %v1175 = vpack.c.b16 %v1160, %v1159
    %v1176 = vpack.c.b16 %v1162, %v1161
    %v1177 = vpack.c.b16 %v1164, %v1163
    %v1178 = vpack.c.b16 %v1166, %v1165
    %v1179 = vpack.c.b16 %v1168, %v1167
    %v1180 = vpack.c.b16 %v1170, %v1169
    %v1181 = vpack.c.b16 %v1172, %v1171
    %v1182 = vpack.c.b16 %v1174, %v1173
    %1191 = vmatprep.subr.bf16.mxu0 0
    %1192 = vmatpush1.bf16.msra.mxu0 %v1175
    %1193 = vmatprep.subr.bf16.mxu0 0
    %1194 = vmatpush1.bf16.msra.mxu0 %v1176
    %1195 = vmatprep.subr.bf16.mxu0 0
    %1196 = vmatpush1.bf16.msra.mxu0 %v1177
    %1197 = vmatprep.subr.bf16.mxu0 0
    %1198 = vmatpush1.bf16.msra.mxu0 %v1178
    %1199 = vmatprep.subr.bf16.mxu0 0
    %1200 = vmatpush1.bf16.msra.mxu0 %v1179
    %1201 = vmatprep.subr.bf16.mxu0 0
    %1202 = vmatpush1.bf16.msra.mxu0 %v1180
    %1203 = vmatprep.subr.bf16.mxu0 0
    %1204 = vmatpush1.bf16.msra.mxu0 %v1181
    %1205 = vmatprep.subr.bf16.mxu0 0
    %1206 = vmatpush1.bf16.msra.mxu0 %v1182
    %1207 = vmatprep.subr.bf16.mxu0 0
    %1208 = vmatpush1.bf16.msra.mxu0 0
    %1209 = vmatprep.subr.bf16.mxu0 0
    %1210 = vmatpush1.bf16.msra.mxu0 0
    %1211 = vmatprep.subr.bf16.mxu0 0
    %1212 = vmatpush1.bf16.msra.mxu0 0
    %1213 = vmatprep.subr.bf16.mxu0 0
    %1214 = vmatpush1.bf16.msra.mxu0 0
    %1215 = vmatprep.subr.bf16.mxu0 0
    %1216 = vmatpush1.bf16.msra.mxu0 0
    %1217 = vmatprep.subr.bf16.mxu0 0
    %1218 = vmatpush1.bf16.msra.mxu0 0
    %1219 = vmatprep.subr.bf16.mxu0 0
    %1220 = vmatpush1.bf16.msra.mxu0 0
    %1221 = vmatprep.subr.bf16.mxu0 0
    %1222 = vmatpush1.bf16.msra.mxu0 0
    %1223 = vmatprep.mubr.bf16.mxu0 0
    %1224 = vmatmul.mubr.bf16.gmra.mrb[0].mxu0 %v1119
    %v1225 = vpop.f32.mrb[0].mxu0
    %v1226 = vadd.f32 %v1141, %v1225
    %v1227 = vpop.f32.mrb[0].mxu0
    %v1228 = vpop.f32.mrb[0].mxu0
    %v1229 = vpop.f32.mrb[0].mxu0
    %1230 = vdwg.mxu0
    %v1231 = vmax.f32 %v1226, 0.0
    %v1232 = vpack.c.bf16 %v1231, %v1231
    %v1233 = vld [vmem:[%s7] sm:$0xf]
    %v1234 = vld [vmem:[%s7 + $0x4] sm:$0xf]
    %v1235 = vld [vmem:[%s7 + $0x8] sm:$0xf]
    %v1236 = vld [vmem:[%s7 + $0xc] sm:$0xf]
    %v1237 = vld [vmem:[%s7 + $0x10] sm:$0xf]
    %v1238 = vld [vmem:[%s7 + $0x14] sm:$0xf]
    %v1239 = vld [vmem:[%s7 + $0x18] sm:$0xf]
    %v1240 = vld [vmem:[%s7 + $0x1c] sm:$0xf]
    %v1241 = vld [vmem:[%s8] sm:$0x1]
    %v1243 = vlaneseq
    %v1244 = vshrl.u32 %v1243, 7
    %v1245 = vsub.s32 0, %v1244
    %v1246 = vrot.slane %v1241, %v1245
    %v1256 = vunpack.c.l.b16 %v1233
    %v1257 = vunpack.c.l.b16 %v1234
    %v1258 = vunpack.c.l.b16 %v1235
    %v1259 = vunpack.c.l.b16 %v1236
    %v1260 = vunpack.c.l.b16 %v1237
    %v1261 = vunpack.c.l.b16 %v1238
    %v1262 = vunpack.c.l.b16 %v1239
    %v1263 = vunpack.c.l.b16 %v1240
    %v1264 = vpack.c.b16 %v1257, %v1256
    %v1265 = vpack.c.b16 %v1259, %v1258
    %v1266 = vpack.c.b16 %v1261, %v1260
    %v1267 = vpack.c.b16 %v1263, %v1262
    %vm1272 = vcmask 523264
    %v1274 = vsel %vm1272, %v1232, 0
    %1276 = vmatprep.subr.bf16.mxu0 0
    %1277 = vmatpush1.bf16.msra.mxu0 %v1264
    %1278 = vmatprep.subr.bf16.mxu0 0
    %1279 = vmatpush1.bf16.msra.mxu0 %v1265
    %1280 = vmatprep.subr.bf16.mxu0 0
    %1281 = vmatpush1.bf16.msra.mxu0 %v1266
    %1282 = vmatprep.subr.bf16.mxu0 0
    %1283 = vmatpush1.bf16.msra.mxu0 %v1267
    %1284 = vmatprep.subr.bf16.mxu0 0
    %1285 = vmatpush1.bf16.msra.mxu0 0
    %1286 = vmatprep.subr.bf16.mxu0 0
    %1287 = vmatpush1.bf16.msra.mxu0 0
    %1288 = vmatprep.subr.bf16.mxu0 0
    %1289 = vmatpush1.bf16.msra.mxu0 0
    %1290 = vmatprep.subr.bf16.mxu0 0
    %1291 = vmatpush1.bf16.msra.mxu0 0
    %1292 = vmatprep.subr.bf16.mxu0 0
    %1293 = vmatpush1.bf16.msra.mxu0 0
    %1294 = vmatprep.subr.bf16.mxu0 0
    %1295 = vmatpush1.bf16.msra.mxu0 0
    %1296 = vmatprep.subr.bf16.mxu0 0
    %1297 = vmatpush1.bf16.msra.mxu0 0
    %1298 = vmatprep.subr.bf16.mxu0 0
    %1299 = vmatpush1.bf16.msra.mxu0 0
    %1300 = vmatprep.subr.bf16.mxu0 0
    %1301 = vmatpush1.bf16.msra.mxu0 0
    %1302 = vmatprep.subr.bf16.mxu0 0
    %1303 = vmatpush1.bf16.msra.mxu0 0
    %1304 = vmatprep.subr.bf16.mxu0 0
    %1305 = vmatpush1.bf16.msra.mxu0 0
    %1306 = vmatprep.subr.bf16.mxu0 0
    %1307 = vmatpush1.bf16.msra.mxu0 0
    %1308 = vmatprep.mubr.bf16.mxu0 0
    %1309 = vmatmul.mubr.bf16.gmra.mrb[0].mxu0 %v1274
    %v1310 = vpop.f32.mrb[0].mxu0
    %v1311 = vadd.f32 %v1246, %v1310
    %v1312 = vpop.f32.mrb[0].mxu0
    %v1313 = vpop.f32.mrb[0].mxu0
    %v1314 = vpop.f32.mrb[0].mxu0
    %1315 = vdwg.mxu0
    %1316 = vmax.xlane.f32.xlu0 %v1311
    %v1317 = vpop.xlane.xlu0 %1316
    %v1318 = vsub.f32 %v1311, %v1317
    %v1319 = vmul.f32 %v1318, 1.442695
    %v1320 = vpow.pop %v1319
    %1321 = vadd.xlane.f32.xlu0 %v1320
    %v1322 = vpop.xlane.xlu0 %1321
    %v1323 = vlog2.pop %v1322
    %v1324 = vmul.f32 %v1323, 0.6931472
    %v1325 = vsub.f32 %v1318, %v1324
    %1326 = vst [vmem:[#allocation7] sm:$0xff] %v1325
    // Predicated region
    $region46: #{tpu_custom_call.1} parent=1 // pred_check
      _
    $region47: #{tpu_custom_call.1} parent=1 // pred_check_branch
      %1328 = sbr.rel (0) target = $region49
    $region48: #{tpu_custom_call.1} parent=1 // pred_region
      %s1330 = ssub.s32 128, 128
      %1331 = vsyncadd [#allocation4], %s1330
      %s1333 = sshll.u32 [#allocation7], 4
      %s1334 = int_to_ptr.vmem [resolvable:$true] %s1333
      %1336 = dma.vmem_to_hbm [thread:$0]  %s1334, 128, %s9, [#allocation4]
    $region49: #{tpu_custom_call.1} parent=1 // pred_fallthru
      _
    // Predicated region
    $region50: #{tpu_custom_call.1} parent=1 // pred_check
      _
    $region51: #{tpu_custom_call.1} parent=1 // pred_check_branch
      %1338 = sbr.rel (0) target = $region53
    $region52: #{tpu_custom_call.1} parent=1 // pred_region
      %1339 = dma.done [#allocation4], 128
    $region53: #{tpu_custom_call.1} parent=1 // pred_fallthru
      _
    %1340 = vsyncpa [#allocation3], 1
    %1341 = vsyncpa [#allocation6], 1
    %1342 = vsyncpa [#allocation4], 1

</llo_original>
